<compile_context>
chip_gen: v7x
topology: tpu7x:2x2x1
jax: 0.10.0
libtpu: 0.0.40
codegen_flags: <defaults>
</compile_context>

<pallas_src>
import functools

import jax
import jax.numpy as jnp
from jax import lax
from jax.experimental import pallas as pl
from jax.experimental.pallas import tpu as pltpu


def _round_up(v, m):
    return (v + m - 1) // m * m


def _pick_tile(dim, pref, align):
    """Largest sensible tile: the (aligned) full dim if it fits under `pref`,
    else an `align`-multiple divisor of the dim (avoids padding), else `pref`."""
    dim_a = _round_up(dim, align)
    if dim_a <= pref:
        return dim_a
    if dim % align == 0:
        t = pref - (pref % align)
        while t >= align:
            if dim % t == 0:
                return t
            t -= align
    return pref


def _linear_kernel_multi_k(x_ref, w_ref, b_ref, o_ref, acc_ref, *, cast_bf16):
    # x_ref: (tm, tk), w_ref: (tn, tk) (natural (n_neurons, K) layout),
    # b_ref: (1, tn), o_ref: (tm, tn), acc_ref: (tm, tn) f32.
    k = pl.program_id(2)

    @pl.when(k == 0)
    def _():
        acc_ref[...] = jnp.zeros_like(acc_ref)

    xt = x_ref[...]
    wt = w_ref[...]
    if cast_bf16:
        xt = xt.astype(jnp.bfloat16)
        wt = wt.astype(jnp.bfloat16)
    # NT matmul: contract the last dim of both operands -> no HBM weight transpose.
    acc_ref[...] += lax.dot_general(
        xt, wt,
        dimension_numbers=(((1,), (1,)), ((), ())),
        preferred_element_type=jnp.float32,
    )

    @pl.when(k == pl.num_programs(2) - 1)
    def _():
        o_ref[...] = (acc_ref[...] + b_ref[...].astype(jnp.float32)).astype(o_ref.dtype)


def _linear_kernel_single_k(x_ref, w_ref, b_ref, o_ref, *, cast_bf16):
    # Fast path: whole K fits in one tile -> no accumulator scratch, no pl.when.
    xt = x_ref[...]
    wt = w_ref[...]
    if cast_bf16:
        xt = xt.astype(jnp.bfloat16)
        wt = wt.astype(jnp.bfloat16)
    acc = lax.dot_general(
        xt, wt,
        dimension_numbers=(((1,), (1,)), ((), ())),
        preferred_element_type=jnp.float32,
    )
    o_ref[...] = (acc + b_ref[...].astype(jnp.float32)).astype(o_ref.dtype)


def linear_forward(x, weight, bias=None, *, max_norm=None, combine_dims=False,
                   cast_to_bf16=False, tm_pref=512, tn_pref=512, tk_pref=1024):
    """x: (..., input_size); weight: (n_neurons, input_size); bias: (n_neurons,) or None.

    Returns (..., n_neurons), matching the PyTorch module's forward.
    """
    if x.ndim == 4 and combine_dims:
        x = x.reshape(x.shape[0], x.shape[1], x.shape[2] * x.shape[3])

    if max_norm is not None:
        # torch.renorm(weight, p=2, dim=0, maxnorm=max_norm): parameter-side op.
        norms = jnp.sqrt(
            jnp.sum(jnp.square(weight.astype(jnp.float32)), axis=1, keepdims=True)
        )
        scale = jnp.where(norms > max_norm, max_norm / (norms + 1e-7), 1.0)
        weight = (weight.astype(jnp.float32) * scale).astype(weight.dtype)

    *lead, K = x.shape
    Nout, K_w = weight.shape
    assert K == K_w, "weight input_size must match x's last dim"
    M = 1
    for d in lead:
        M *= d

    x2 = x.reshape(M, K)
    b = bias if bias is not None else jnp.zeros((Nout,), dtype=x.dtype)

    # Tile sizes: lane dims (tk, tn) multiples of 128, sublane (tm) multiples of 8.
    # Preferences are 256-aligned for the 2x256 MXU on v6e/v7x.
    tm = _pick_tile(M, tm_pref, 8)
    tn = _pick_tile(Nout, tn_pref, 128)
    tk = _pick_tile(K, tk_pref, 128)

    Mp, Kp, Np = _round_up(M, tm), _round_up(K, tk), _round_up(Nout, tn)

    # v7x has 2 TensorCores: expose >= 2 parallel output tiles when possible.
    if (Mp // tm) * (Np // tn) == 1:
        if tn >= 256 and tn % 256 == 0:
            tn //= 2
        elif tm >= 16 and tm % 16 == 0:
            tm //= 2

    # Pad only when the shapes actually need it (in a real model, pre-pad and
    # cache the weight once since it's a parameter).
    x_p = x2 if (Mp == M and Kp == K) else jnp.pad(x2, ((0, Mp - M), (0, Kp - K)))
    w_p = weight if (Np == Nout and Kp == K) else jnp.pad(
        weight, ((0, Np - Nout), (0, Kp - K)))
    b_p = b.reshape(1, Nout)
    if Np != Nout:
        b_p = jnp.pad(b_p, ((0, 0), (0, Np - Nout)))

    gm, gn, gk = Mp // tm, Np // tn, Kp // tk

    itemsize = jnp.dtype(x.dtype).itemsize
    cost = pl.CostEstimate(
        flops=2 * M * K * Nout,
        transcendentals=0,
        # Actual streamed traffic: x re-read per N tile, W re-read per M tile.
        bytes_accessed=(Mp * Kp * gn + Np * Kp * gm + Np * gm + Mp * Np) * itemsize,
    )

    # VMEM budget: double-buffered x/W/bias/out tiles (+ f32 acc on multi-K path).
    needed = 2 * (tm * tk + tn * tk + tn) * itemsize + 2 * tm * tn * itemsize
    if gk > 1:
        needed += tm * tn * 4
    vmem_limit = int(min(64 * 1024 * 1024, max(2 * needed, 32 * 1024 * 1024)))

    if gk == 1:
        kernel = functools.partial(_linear_kernel_single_k, cast_bf16=cast_to_bf16)
        out_p = pl.pallas_call(
            kernel,
            out_shape=jax.ShapeDtypeStruct((Mp, Np), x.dtype),
            grid_spec=pltpu.PrefetchScalarGridSpec(
                num_scalar_prefetch=0,
                grid=(gm, gn),
                in_specs=[
                    pl.BlockSpec((tm, tk), lambda i, j: (i, 0)),
                    pl.BlockSpec((tn, tk), lambda i, j: (j, 0)),
                    pl.BlockSpec((1, tn), lambda i, j: (0, j)),
                ],
                out_specs=pl.BlockSpec((tm, tn), lambda i, j: (i, j)),
            ),
            compiler_params=pltpu.CompilerParams(
                dimension_semantics=("parallel", "parallel"),
                vmem_limit_bytes=vmem_limit,
            ),
            cost_estimate=cost,
        )(x_p, w_p, b_p)
    else:
        kernel = functools.partial(_linear_kernel_multi_k, cast_bf16=cast_to_bf16)
        out_p = pl.pallas_call(
            kernel,
            out_shape=jax.ShapeDtypeStruct((Mp, Np), x.dtype),
            grid_spec=pltpu.PrefetchScalarGridSpec(
                num_scalar_prefetch=0,
                grid=(gm, gn, gk),
                in_specs=[
                    pl.BlockSpec((tm, tk), lambda i, j, k: (i, k)),
                    pl.BlockSpec((tn, tk), lambda i, j, k: (j, k)),
                    pl.BlockSpec((1, tn), lambda i, j, k: (0, j)),
                ],
                out_specs=pl.BlockSpec((tm, tn), lambda i, j, k: (i, j)),
                scratch_shapes=[pltpu.VMEM((tm, tn), jnp.float32)],
            ),
            compiler_params=pltpu.CompilerParams(
                dimension_semantics=("parallel", "parallel", "arbitrary"),
                vmem_limit_bytes=vmem_limit,
            ),
            cost_estimate=cost,
        )(x_p, w_p, b_p)

    out = out_p if (Mp == M and Np == Nout) else out_p[:M, :Nout]
    return out.reshape(*lead, Nout)


def _reference(x, weight, bias):
    y = jnp.einsum("...k,nk->...n", x, weight)
    if bias is not None:
        y = y + bias
    return y


if __name__ == "__main__":
    key = jax.random.PRNGKey(0)
    kx, kw, kb, kx2, kw2 = jax.random.split(key, 5)

    # Case 1: module-default config (bias=True), exercises the single-K fast path.
    B, T, input_size, n_neurons = 2, 8, 32, 64
    x = jax.random.normal(kx, (B, T, input_size), dtype=jnp.float32)
    bound = 1.0 / (input_size ** 0.5)  # nn.Linear-style init
    weight = jax.random.uniform(
        kw, (n_neurons, input_size), minval=-bound, maxval=bound, dtype=jnp.float32
    )
    bias = jax.random.uniform(
        kb, (n_neurons,), minval=-bound, maxval=bound, dtype=jnp.float32
    )

    out = jax.block_until_ready(linear_forward(x, weight, bias))
    ref = _reference(x, weight, bias)
    assert out.shape == (B, T, n_neurons)
    assert jnp.allclose(out, ref, atol=1e-5, rtol=1e-5), "mismatch vs reference (case 1)"

    # Case 2: exercise the multi-K accumulator path (tk forced small) with a
    # ragged K that requires zero-padding, and bias=None.
    K2, N2 = 288, 64
    x2 = jax.random.normal(kx2, (B, T, K2), dtype=jnp.float32)
    bound2 = 1.0 / (K2 ** 0.5)
    w2 = jax.random.uniform(
        kw2, (N2, K2), minval=-bound2, maxval=bound2, dtype=jnp.float32
    )
    out2 = jax.block_until_ready(linear_forward(x2, w2, None, tk_pref=128))
    ref2 = _reference(x2, w2, None)
    assert out2.shape == (B, T, N2)
    assert jnp.allclose(out2, ref2, atol=1e-4, rtol=1e-4), "mismatch vs reference (case 2)"

    print("KERNEL_OK")
</pallas_src>

<mosaic_0001>
module attributes {stable_mosaic.version = 11 : i64} {
  func.func @_linear_kernel_single_k(%arg0: i32, %arg1: i32, %arg2: memref<8x128xf32, #tpu.memory_space<vmem>>, %arg3: memref<128x128xf32, #tpu.memory_space<vmem>>, %arg4: memref<1x128xf32, #tpu.memory_space<vmem>>, %arg5: memref<8x128xf32, #tpu.memory_space<vmem>>) attributes {dimension_semantics = [#tpu.dimension_semantics<parallel>, #tpu.dimension_semantics<parallel>], iteration_bounds = array<i64: 2, 1>, scalar_prefetch = 0 : i64, scratch_operands = 0 : i64, tpu.core_type = #tpu.core_type<tc>, window_params = [{transform_indices = @transform_0, window_bounds = array<i64: 8, 128>}, {transform_indices = @transform_1, window_bounds = array<i64: 128, 128>}, {transform_indices = @transform_2, window_bounds = array<i64: 1, 128>}, {transform_indices = @transform_3, window_bounds = array<i64: 8, 128>}]} {
    %c0 = arith.constant 0 : index
    %c0_0 = arith.constant 0 : index
    %0 = vector.load %arg2[%c0, %c0_0] : memref<8x128xf32, #tpu.memory_space<vmem>>, vector<8x128xf32>
    %c0_1 = arith.constant 0 : index
    %c0_2 = arith.constant 0 : index
    %1 = vector.load %arg3[%c0_1, %c0_2] : memref<128x128xf32, #tpu.memory_space<vmem>>, vector<128x128xf32>
    %cst = arith.constant dense<0.000000e+00> : vector<8x128xf32>
    %2 = tpu.matmul %0, %1, %cst {dimension_numbers = #tpu.dot_dimension_numbers<[1], [1], [0], [0], [0, 0, 1, 0], [], []>} : vector<8x128xf32>, vector<128x128xf32>, vector<8x128xf32> -> vector<8x128xf32>
    %c0_3 = arith.constant 0 : index
    %c0_4 = arith.constant 0 : index
    %3 = vector.load %arg4[%c0_3, %c0_4] : memref<1x128xf32, #tpu.memory_space<vmem>>, vector<1x128xf32>
    %4 = vector.broadcast %3 : vector<1x128xf32> to vector<8x128xf32>
    %5 = arith.addf %2, %4 : vector<8x128xf32>
    %c0_5 = arith.constant 0 : index
    %c0_6 = arith.constant 0 : index
    %6 = vector.load %arg5[%c0_5, %c0_6] : memref<8x128xf32, #tpu.memory_space<vmem>>, vector<8x128xf32>
    tpu.vector_store %arg5[%c0_5, %c0_6], %5 {strides = array<i32>} : memref<8x128xf32, #tpu.memory_space<vmem>>, vector<8x128xf32>,
    return
  }
  func.func @transform_0(%arg0: i32, %arg1: i32) -> (i32, i32) {
    %c0_i32 = arith.constant 0 : i32
    %c0_i32_0 = arith.constant 0 : i32
    return %arg0, %c0_i32 : i32, i32
  }
  func.func @transform_1(%arg0: i32, %arg1: i32) -> (i32, i32) {
    %c0_i32 = arith.constant 0 : i32
    %c0_i32_0 = arith.constant 0 : i32
    return %arg1, %c0_i32 : i32, i32
  }
  func.func @transform_2(%arg0: i32, %arg1: i32) -> (i32, i32) {
    %c0_i32 = arith.constant 0 : i32
    %c0_i32_0 = arith.constant 0 : i32
    return %c0_i32, %arg1 : i32, i32
  }
  func.func @transform_3(%arg0: i32, %arg1: i32) -> (i32, i32) {
    %c0_i32 = arith.constant 0 : i32
    return %arg0, %arg1 : i32, i32
  }
}

</mosaic_0001>

<llo_original>
// kernel: tpu_custom_call.1
$region0: #{tpu_custom_call.1}
  #allocation0 [shape = 'u32[]', space=smem, size = 0x4, offset = 0x4, fixed_abs, tag = 'smem constant byte address 0x4 - core index']
  #allocation1 [shape = 'u32[144,128]{1,0:T(1,128)}', space=vmem, size = 0x12000, scoped, tag = 'internal scratch']
  %s0 = inlined_call_operand.hbm [shape: f32[16,128], index: 0, kind: input, shape index: {}]
  %s1 = inlined_call_operand.hbm [shape: f32[128,128], index: 1, kind: input, shape index: {}]
  %s2 = inlined_call_operand.vmem [shape: f32[1,128], index: 2, kind: input, shape index: {}]
  %s3 = inlined_call_operand.hbm [shape: f32[16,128], index: 3, kind: output, shape index: {}]
  %s4 = sld [smem:[#allocation0]]
  $region53: #{tpu_custom_call.1} parent=0
    _
  %s6 = ssub.s32 1, %s4
  %s7 = scalar_select 0, %s6, %s4
  $region1: #{tpu_custom_call.1} parent=0
    #allocation2 [shape = 'u8[8192]{0}', space=vmem, size = 0x2000, scoped, tag = 'input window, operand 0']
    #allocation3 [shape = 's32[2]{0}', space=sflag, size = 0x8, scoped, tag = 'scoped memory for tpu_custom_call.1']
    #allocation4 [shape = 's32[2]{0}', space=sflag, size = 0x8, scoped, tag = 'scoped memory for tpu_custom_call.1']
    #allocation5 [shape = 'u8[65536]{0}', space=vmem, size = 0x10000, scoped, tag = 'input window, operand 1, single buffered']
    #allocation6 [shape = 's32[1]{0}', space=sflag, size = 0x4, scoped, tag = 'scoped memory for tpu_custom_call.1']
    #allocation7 [shape = 'u8[8192]{0}', space=vmem, size = 0x2000, scoped, tag = 'output window, operand 0']
    %8 = vsyncpa [#allocation3], 0
    %s9 = scalar_lea.sflag [#allocation3], 1
    %10 = vsyncpa %s9, 0
    %11 = vsyncpa [#allocation6], 0
    %12 = vsyncpa [#allocation4], 0
    %s13 = scalar_lea.sflag [#allocation4], 1
    %14 = vsyncpa %s13, 0
    loop: start=0, step=1, limit=4
    $region2: #{tpu_custom_call.1} parent=1 // loop_pre_header
      _
    $region3: #{tpu_custom_call.1} parent=1 // loop_header
      %s16 = sphi 0, %s20
      %p17 = scmp.ge.s32.totalorder %s16, 4
      %s23 = sphi 0, %s35
      %s24 = sphi 0, %s31
      %s25 = sphi 0, %s23
      %s26 = sphi 0, %s24
      %s27 = sphi 0, %s25
      %s28 = sphi 0, %s26
      %s38 = sphi 0, %s40
      %s41 = sphi 0, %s38
      %s42 = sphi 0, %s41
      %s58 = sphi 0, %s42
      %s64 = sphi 0, %s66
      %s67 = sphi 0, %s64
      %s68 = sphi 0, %s67
      %s84 = sphi 0, %s68
      %s90 = sphi 0, %s92
      %s93 = sphi 0, %s90
      %s94 = sphi 0, %s93
      %s110 = sphi 0, %s94
      %s118 = sphi 0, %s120
      %s121 = sphi 0, %s118
      %s122 = sphi 0, %s121
      %s138 = sphi 0, %s122
    $region4: #{tpu_custom_call.1} parent=1 // loop_header_branch
      %19 = sbr.rel (%p17) target = $region8
    $region5: #{tpu_custom_call.1} parent=1 // loop_body
      %s21 = ssub.s32 %s16, 1
      %s22 = ssub.s32 %s16, 2
      %s29 = sadd.s32 1, %s24
      %p30 = scmp.ge.s32.totalorder %s29, 1
      %s31 = scalar_select %p30, 0, %s29
      %s32 = sadd.s32 1, %s23
      %s33 = scalar_select %p30, %s32, %s23
      %p34 = scmp.ge.s32.totalorder %s33, 2
      %s35 = scalar_select %p34, 0, %s33
      %s36 = ssub.s32 %s23, %s35
      %p37 = scmp.eq.s32.totalorder %s36, 0
      %s39 = sadd.s32 %s38, 1
      %s40 = scalar_select %p37, %s38, %s39
      %p43 = pneg %p37
      %p44 = scmp.eq.s32.totalorder %s16, 1
      %p45 = por %p43, %p44
      %p46 = scmp.ne.s32.totalorder %s38, %s41
      %p47 = scmp.eq.s32.totalorder %s16, 0
      %p48 = por %p46, %p47
      %p49 = scmp.ne.s32.totalorder %s38, %s41
      %p50 = scmp.eq.s32.totalorder %s21, 1
      %p51 = por %p49, %p50
      %p52 = scmp.ne.s32.totalorder %s41, %s42
      %p53 = scmp.eq.s32.totalorder %s21, 0
      %p54 = por %p52, %p53
      %p55 = scmp.ne.s32.totalorder %s41, %s42
      %p56 = scmp.eq.s32.totalorder %s22, 1
      %p57 = por %p55, %p56
      %p59 = scmp.ne.s32.totalorder %s42, %s58
      %p60 = scmp.eq.s32.totalorder %s22, 0
      %p61 = por %p59, %p60
      %s62 = ssub.s32 %s24, %s31
      %p63 = scmp.eq.s32.totalorder %s62, 0
      %s65 = sadd.s32 %s64, 1
      %s66 = scalar_select %p63, %s64, %s65
      %p69 = pneg %p63
      %p70 = scmp.eq.s32.totalorder %s16, 1
      %p71 = por %p69, %p70
      %p72 = scmp.ne.s32.totalorder %s64, %s67
      %p73 = scmp.eq.s32.totalorder %s16, 0
      %p74 = por %p72, %p73
      %p75 = scmp.ne.s32.totalorder %s64, %s67
      %p76 = scmp.eq.s32.totalorder %s21, 1
      %p77 = por %p75, %p76
      %p78 = scmp.ne.s32.totalorder %s67, %s68
      %p79 = scmp.eq.s32.totalorder %s21, 0
      %p80 = por %p78, %p79
      %p81 = scmp.ne.s32.totalorder %s67, %s68
      %p82 = scmp.eq.s32.totalorder %s22, 1
      %p83 = por %p81, %p82
      %p85 = scmp.ne.s32.totalorder %s68, %s84
      %p86 = scmp.eq.s32.totalorder %s22, 0
      %p87 = por %p85, %p86
      %s88 = ssub.s32 %s24, %s31
      %p89 = scmp.eq.s32.totalorder %s88, 0
      %s91 = sadd.s32 %s90, 1
      %s92 = scalar_select %p89, %s90, %s91
      %p95 = pneg %p89
      %p96 = scmp.eq.s32.totalorder %s16, 1
      %p97 = por %p95, %p96
      %p98 = scmp.ne.s32.totalorder %s90, %s93
      %p99 = scmp.eq.s32.totalorder %s16, 0
      %p100 = por %p98, %p99
      %p101 = scmp.ne.s32.totalorder %s90, %s93
      %p102 = scmp.eq.s32.totalorder %s21, 1
      %p103 = por %p101, %p102
      %p104 = scmp.ne.s32.totalorder %s93, %s94
      %p105 = scmp.eq.s32.totalorder %s21, 0
      %p106 = por %p104, %p105
      %p107 = scmp.ne.s32.totalorder %s93, %s94
      %p108 = scmp.eq.s32.totalorder %s22, 1
      %p109 = por %p107, %p108
      %p111 = scmp.ne.s32.totalorder %s94, %s110
      %p112 = scmp.eq.s32.totalorder %s22, 0
      %p113 = por %p111, %p112
      %s114 = ssub.s32 %s23, %s35
      %s115 = ssub.s32 %s24, %s31
      %s116 = sor.u32 %s114, %s115
      %p117 = scmp.eq.s32.totalorder %s116, 0
      %s119 = sadd.s32 %s118, 1
      %s120 = scalar_select %p117, %s118, %s119
      %p123 = pneg %p117
      %p124 = scmp.eq.s32.totalorder %s16, 1
      %p125 = por %p123, %p124
      %p126 = scmp.ne.s32.totalorder %s118, %s121
      %p127 = scmp.eq.s32.totalorder %s16, 0
      %p128 = por %p126, %p127
      %p129 = scmp.ne.s32.totalorder %s118, %s121
      %p130 = scmp.eq.s32.totalorder %s21, 1
      %p131 = por %p129, %p130
      %p132 = scmp.ne.s32.totalorder %s121, %s122
      %p133 = scmp.eq.s32.totalorder %s21, 0
      %p134 = por %p132, %p133
      %p135 = scmp.ne.s32.totalorder %s121, %s122
      %p136 = scmp.eq.s32.totalorder %s22, 1
      %p137 = por %p135, %p136
      %p139 = scmp.ne.s32.totalorder %s122, %s138
      %p140 = scmp.eq.s32.totalorder %s22, 0
      %p141 = por %p139, %p140
      %p142 = scmp.le.s32.totalorder 1, %s16
      %p143 = scmp.lt.s32.totalorder %s16, 3
      %p144 = pnand %p142, %p143
      %p145 = pneg %p144
      // Predicated region
      $region9: #{tpu_custom_call.1} parent=5 // pred_check
        _
      $region10: #{tpu_custom_call.1} parent=5 // pred_check_branch
        %147 = sbr.rel (%p144) target = $region12
      $region11: #{tpu_custom_call.1} parent=5 // pred_region
        %s148 = ssub.s32 %s16, 1
        // Predicated region
        $region13: #{tpu_custom_call.1} parent=11 // pred_check
          %p149 = pneg %p80
        $region14: #{tpu_custom_call.1} parent=11 // pred_check_branch
          %151 = sbr.rel (%p149) target = $region16
        $region15: #{tpu_custom_call.1} parent=11 // pred_region
          %s152 = smul.u32 16, %s26
          %s154 = ssub.s32 2048, 2048
          %155 = vsyncadd [#allocation6], %s154
          %s156 = smul.addr %s152, 128
          %s157 = scalar_lea.hbm %s1, %s156
          %s158 = sshll.u32 [#allocation5], 4
          %s159 = int_to_ptr.vmem [resolvable:$true] %s158
          %164 = dma.hbm_to_vmem [thread:$0]  %s157, 2048, %s159, [#allocation6], 128, 128, 8
        $region16: #{tpu_custom_call.1} parent=11 // pred_fallthru
          _
        // Predicated region
        $region17: #{tpu_custom_call.1} parent=11 // pred_check
          %p165 = pneg %p106
        $region18: #{tpu_custom_call.1} parent=11 // pred_check_branch
          %167 = sbr.rel (%p165) target = $region20
        $region19: #{tpu_custom_call.1} parent=11 // pred_region
          %p168 = scmp.lt.s32.totalorder %s26, 0
          %s169 = scalar_select %p168, %s26, 0
          %s170 = scalar_lea.vmem %s2, %s169
        $region20: #{tpu_custom_call.1} parent=11 // pred_fallthru
          _
      $region12: #{tpu_custom_call.1} parent=5 // pred_fallthru
        _
      %p171 = scmp.lt.s32.totalorder %s16, 2
      // Predicated region
      $region21: #{tpu_custom_call.1} parent=5 // pred_check
        %p172 = pneg %p171
      $region22: #{tpu_custom_call.1} parent=5 // pred_check_branch
        %174 = sbr.rel (%p172) target = $region24
      $region23: #{tpu_custom_call.1} parent=5 // pred_region
        // Predicated region
        $region25: #{tpu_custom_call.1} parent=23 // pred_check
          %p175 = pneg %p48
        $region26: #{tpu_custom_call.1} parent=23 // pred_check_branch
          %177 = sbr.rel (%p175) target = $region28
        $region27: #{tpu_custom_call.1} parent=23 // pred_region
          %s178 = sand.u32 %s38, 1
          %s179 = scalar_lea.sflag [#allocation3], %s178
          %s180 = sand.u32 %s38, 1
          %s181 = smul.addr %s180, 8
          %s182 = scalar_lea.vmem [#allocation2], %s181
          %s184 = ssub.s32 128, 128
          %185 = vsyncadd %s179, %s184
          %s186 = smul.addr %s23, 128
          %s187 = scalar_lea.hbm %s0, %s186
          %s189 = sshll.u32 %s182, 4
          %s190 = int_to_ptr.vmem [resolvable:$true] %s189
          %192 = dma.hbm_to_vmem [thread:$0]  %s187, 128, %s190, %s179
        $region28: #{tpu_custom_call.1} parent=23 // pred_fallthru
          _
      $region24: #{tpu_custom_call.1} parent=5 // pred_fallthru
        _
      %p193 = scmp.le.s32.totalorder 1, %s16
      %p194 = scmp.lt.s32.totalorder %s16, 3
      %p195 = pnand %p193, %p194
      %p196 = pneg %p195
      // Predicated region
      $region29: #{tpu_custom_call.1} parent=5 // pred_check
        _
      $region30: #{tpu_custom_call.1} parent=5 // pred_check_branch
        %198 = sbr.rel (%p195) target = $region32
      $region31: #{tpu_custom_call.1} parent=5 // pred_region
        %s199 = ssub.s32 %s16, 1
        %s200 = sand.u32 %s41, 1
        %s201 = scalar_lea.sflag [#allocation3], %s200
        %s202 = sand.u32 %s41, 1
        %s203 = smul.addr %s202, 8
        %s204 = scalar_lea.vmem [#allocation2], %s203
        // Predicated region
        $region33: #{tpu_custom_call.1} parent=31 // pred_check
          %p205 = pneg %p54
        $region34: #{tpu_custom_call.1} parent=31 // pred_check_branch
          %207 = sbr.rel (%p205) target = $region36
        $region35: #{tpu_custom_call.1} parent=31 // pred_region
          %208 = dma.done %s201, 128
        $region36: #{tpu_custom_call.1} parent=31 // pred_fallthru
          _
        // Predicated region
        $region37: #{tpu_custom_call.1} parent=31 // pred_check
          %p209 = pneg %p80
        $region38: #{tpu_custom_call.1} parent=31 // pred_check_branch
          %211 = sbr.rel (%p209) target = $region40
        $region39: #{tpu_custom_call.1} parent=31 // pred_region
          %212 = dma.done [#allocation6], 2048
        $region40: #{tpu_custom_call.1} parent=31 // pred_fallthru
          _
        %s213 = sand.u32 %s41, 1
        %s214 = scalar_lea.sflag [#allocation3], %s213
        %s215 = sand.u32 %s41, 1
        %s216 = smul.addr %s215, 8
        %s217 = scalar_lea.vmem [#allocation2], %s216
        %p218 = pneg %p54
        %p219 = pneg %p51
        %p220 = pneg %p80
        %p221 = pneg %p77
        %p222 = scmp.lt.s32.totalorder %s26, 0
        %s223 = scalar_select %p222, %s26, 0
        %s224 = scalar_lea.vmem %s2, %s223
        %p225 = pneg %p106
        %p226 = pneg %p103
        %p227 = pneg %p134
        %p228 = pneg %p131
        %s229 = sand.u32 %s121, 1
        %s230 = scalar_lea.sflag [#allocation4], %s229
        %s231 = sand.u32 %s121, 1
        %s232 = smul.addr %s231, 8
        %s233 = scalar_lea.vmem [#allocation7], %s232
        %s234 = smul.u32 16, %s26
        %p235 = scmp.lt.s32.totalorder %s26, 0
        %s236 = scalar_select %p235, %s26, 0
        %s237 = scalar_lea.vmem %s2, %s236
        %v238 = vld [vmem:[%s204] sm:$0xff]
        %v239 = vld [vmem:[#allocation5] sm:$0xff]
        %v240 = vld [vmem:[#allocation5 + $0x8] sm:$0xff]
        %v241 = vld [vmem:[#allocation5 + $0x10] sm:$0xff]
        %v242 = vld [vmem:[#allocation5 + $0x18] sm:$0xff]
        %v243 = vld [vmem:[#allocation5 + $0x20] sm:$0xff]
        %v244 = vld [vmem:[#allocation5 + $0x28] sm:$0xff]
        %v245 = vld [vmem:[#allocation5 + $0x30] sm:$0xff]
        %v246 = vld [vmem:[#allocation5 + $0x38] sm:$0xff]
        %v247 = vld [vmem:[#allocation5 + $0x40] sm:$0xff]
        %v248 = vld [vmem:[#allocation5 + $0x48] sm:$0xff]
        %v249 = vld [vmem:[#allocation5 + $0x50] sm:$0xff]
        %v250 = vld [vmem:[#allocation5 + $0x58] sm:$0xff]
        %v251 = vld [vmem:[#allocation5 + $0x60] sm:$0xff]
        %v252 = vld [vmem:[#allocation5 + $0x68] sm:$0xff]
        %v253 = vld [vmem:[#allocation5 + $0x70] sm:$0xff]
        %v254 = vld [vmem:[#allocation5 + $0x78] sm:$0xff]
        %v255 = vld [vmem:[%s237] sm:$0x1]
        %v257 = vlaneseq
        %v258 = vshrl.u32 %v257, 7
        %v259 = vsub.s32 0, %v258
        %v260 = vrot.slane %v255, %v259
        %262 = vmatprep.subr.mxu0 0.0
        %263 = vmatpush1.xpose.msra.mxu0 %v239
        %264 = vmatprep.subr.mxu0 0.0
        %265 = vmatpush1.xpose.msra.mxu0 %v240
        %266 = vmatprep.subr.mxu0 0.0
        %267 = vmatpush1.xpose.msra.mxu0 %v241
        %268 = vmatprep.subr.mxu0 0.0
        %269 = vmatpush1.xpose.msra.mxu0 %v242
        %270 = vmatprep.subr.mxu0 0.0
        %271 = vmatpush1.xpose.msra.mxu0 %v243
        %272 = vmatprep.subr.mxu0 0.0
        %273 = vmatpush1.xpose.msra.mxu0 %v244
        %274 = vmatprep.subr.mxu0 0.0
        %275 = vmatpush1.xpose.msra.mxu0 %v245
        %276 = vmatprep.subr.mxu0 0.0
        %277 = vmatpush1.xpose.msra.mxu0 %v246
        %278 = vmatprep.subr.mxu0 0.0
        %279 = vmatpush1.xpose.msra.mxu0 %v247
        %280 = vmatprep.subr.mxu0 0.0
        %281 = vmatpush1.xpose.msra.mxu0 %v248
        %282 = vmatprep.subr.mxu0 0.0
        %283 = vmatpush1.xpose.msra.mxu0 %v249
        %284 = vmatprep.subr.mxu0 0.0
        %285 = vmatpush1.xpose.msra.mxu0 %v250
        %286 = vmatprep.subr.mxu0 0.0
        %287 = vmatpush1.xpose.msra.mxu0 %v251
        %288 = vmatprep.subr.mxu0 0.0
        %289 = vmatpush1.xpose.msra.mxu0 %v252
        %290 = vmatprep.subr.mxu0 0.0
        %291 = vmatpush1.xpose.msra.mxu0 %v253
        %292 = vmatprep.subr.mxu0 0.0
        %293 = vmatpush1.xpose.msra.mxu0 %v254
        %294 = vmatprep.subr.mxu0 0.0
        %295 = vmatpush1.xpose.msra.mxu0 0.0
        %296 = vmatprep.subr.mxu0 0.0
        %297 = vmatpush1.xpose.msra.mxu0 0.0
        %298 = vmatprep.subr.mxu0 0.0
        %299 = vmatpush1.xpose.msra.mxu0 0.0
        %300 = vmatprep.subr.mxu0 0.0
        %301 = vmatpush1.xpose.msra.mxu0 0.0
        %302 = vmatprep.subr.mxu0 0.0
        %303 = vmatpush1.xpose.msra.mxu0 0.0
        %304 = vmatprep.subr.mxu0 0.0
        %305 = vmatpush1.xpose.msra.mxu0 0.0
        %306 = vmatprep.subr.mxu0 0.0
        %307 = vmatpush1.xpose.msra.mxu0 0.0
        %308 = vmatprep.subr.mxu0 0.0
        %309 = vmatpush1.xpose.msra.mxu0 0.0
        %310 = vmatprep.subr.mxu0 0.0
        %311 = vmatpush1.xpose.msra.mxu0 0.0
        %312 = vmatprep.subr.mxu0 0.0
        %313 = vmatpush1.xpose.msra.mxu0 0.0
        %314 = vmatprep.subr.mxu0 0.0
        %315 = vmatpush1.xpose.msra.mxu0 0.0
        %316 = vmatprep.subr.mxu0 0.0
        %317 = vmatpush1.xpose.msra.mxu0 0.0
        %318 = vmatprep.subr.mxu0 0.0
        %319 = vmatpush1.xpose.msra.mxu0 0.0
        %320 = vmatprep.subr.mxu0 0.0
        %321 = vmatpush1.xpose.msra.mxu0 0.0
        %322 = vmatprep.subr.mxu0 0.0
        %323 = vmatpush1.xpose.msra.mxu0 0.0
        %324 = vmatprep.subr.mxu0 0.0
        %325 = vmatpush1.xpose.msra.mxu0 0.0
        %326 = vmatprep.mubr.f32.mxu0 0.0
        %327 = vmatmul.mubr.f32.gmra.mrb[0].mxu0 %v238
        %v328 = vpop.f32.mrb[0].mxu0
        %v329 = vadd.f32 %v260, %v328
        %v330 = vpop.f32.mrb[0].mxu0
        %331 = vdwg.mxu0
        %332 = vst [vmem:[%s233] sm:$0xff] %v329
        %s333 = sand.u32 %s121, 1
        %s334 = scalar_lea.sflag [#allocation4], %s333
        %s335 = sand.u32 %s121, 1
        %s336 = smul.addr %s335, 8
        %s337 = scalar_lea.vmem [#allocation7], %s336
        // Predicated region
        $region41: #{tpu_custom_call.1} parent=31 // pred_check
          %p338 = pneg %p131
        $region42: #{tpu_custom_call.1} parent=31 // pred_check_branch
          %340 = sbr.rel (%p338) target = $region44
        $region43: #{tpu_custom_call.1} parent=31 // pred_region
          %s342 = ssub.s32 128, 128
          %343 = vsyncadd %s334, %s342
          %s344 = sadd.s32 %s26, %s25
          %s345 = smul.addr %s344, 128
          %s346 = scalar_lea.hbm %s3, %s345
          %s348 = sshll.u32 %s337, 4
          %s349 = int_to_ptr.vmem [resolvable:$true] %s348
          %351 = dma.vmem_to_hbm [thread:$0]  %s349, 128, %s346, %s334
        $region44: #{tpu_custom_call.1} parent=31 // pred_fallthru
          _
      $region32: #{tpu_custom_call.1} parent=5 // pred_fallthru
        _
      %p352 = scmp.le.s32.totalorder 2, %s16
      // Predicated region
      $region45: #{tpu_custom_call.1} parent=5 // pred_check
        %p353 = pneg %p352
      $region46: #{tpu_custom_call.1} parent=5 // pred_check_branch
        %355 = sbr.rel (%p353) target = $region48
      $region47: #{tpu_custom_call.1} parent=5 // pred_region
        %s356 = ssub.s32 %s16, 2
        // Predicated region
        $region49: #{tpu_custom_call.1} parent=47 // pred_check
          %p357 = pneg %p137
        $region50: #{tpu_custom_call.1} parent=47 // pred_check_branch
          %359 = sbr.rel (%p357) target = $region52
        $region51: #{tpu_custom_call.1} parent=47 // pred_region
          %s360 = sand.u32 %s122, 1
          %s361 = scalar_lea.sflag [#allocation4], %s360
          %s362 = sand.u32 %s122, 1
          %s363 = smul.addr %s362, 8
          %s364 = scalar_lea.vmem [#allocation7], %s363
          %365 = dma.done %s361, 128
        $region52: #{tpu_custom_call.1} parent=47 // pred_fallthru
          _
      $region48: #{tpu_custom_call.1} parent=5 // pred_fallthru
        _
    $region6: #{tpu_custom_call.1} parent=1 // loop_footer
      %s20 = sadd.s32 1, %s16
    $region7: #{tpu_custom_call.1} parent=1 // loop_footer_branch
      %15 = sbr.rel target = $region3
    $region8: #{tpu_custom_call.1} parent=1 // loop_exit
      _
    %366 = vsyncpa [#allocation3], 1
    %s367 = scalar_lea.sflag [#allocation3], 1
    %368 = vsyncpa %s367, 1
    %369 = vsyncpa [#allocation6], 1
    %370 = vsyncpa [#allocation4], 1
    %s371 = scalar_lea.sflag [#allocation4], 1
    %372 = vsyncpa %s371, 1

</llo_original>
